<compile_context>
chip_gen: v7x
topology: tpu7x:2x2x1
jax: 0.10.0
libtpu: 0.0.40
codegen_flags: <defaults>
</compile_context>

<pallas_src>
import numpy as np

import jax
import jax.numpy as jnp
from jax.experimental import pallas as pl
from jax.experimental.pallas import tpu as pltpu

_LANE = 128


def _cdiv(a, b):
    return -(-a // b)


def _round_up(a, b):
    return _cdiv(a, b) * b


def _drop_path_kernel(x_ref, scale_ref, o_ref):
    # (tb, tf) * (tb, 1) broadcast multiply on the VPU.  scale is kept in f32
    # and only the result is cast to the output dtype.
    x = x_ref[...].astype(jnp.float32)
    o_ref[...] = (x * scale_ref[...]).astype(o_ref.dtype)


def _generation_budget():
    """(target_block_bytes, vmem_limit_bytes) tuned per TPU generation."""
    kind = ""
    try:
        kind = jax.devices()[0].device_kind.lower()
    except Exception:
        pass
    if "7" in kind:
        # v7x: ~3.2 TB/s HBM per TC -> bigger blocks to amortize the ~0.35 us
        # per-grid-step cost.  2x(x) + 2x(out) double-buffered = 16 MiB,
        # comfortably under the 32 MiB scoped / 64 MiB physical per-TC VMEM.
        return 4 << 20, 32 << 20
    if "v5" in kind:
        # v5e: ~0.82 TB/s HBM, 16 MiB scoped-VMEM default.  2 MiB blocks are
        # already >=85% of roofline; raise the scoped limit a bit for headroom.
        return 2 << 20, 24 << 20
    # v6e / default.
    return 2 << 20, 32 << 20


def _choose_tiles(B, F, itemsize, target_bytes):
    # Native sublane count per dtype: 8 (f32), 16 (bf16), 32 (int8/fp8).
    sub = max(8, 32 // max(1, itemsize))

    # Feature tile: lane-dense multiple of 128 capped at ~target_bytes for a
    # `sub`-row block; if the cap covers the whole axis, take the full axis
    # (block dim == full array dim is exempt from the 128 rule, zero padding).
    rows = max(1, target_bytes // (sub * _LANE * itemsize))
    tf = rows * _LANE
    if tf >= F:
        tf = F
    # else: tf is a 128-multiple < F; the ragged last block is padded on reads
    # and masked on writes by Pallas, which is safe for an elementwise multiply.

    # Batch tile: whole batch if tiny (full-dim exemption), otherwise grow from
    # the native sublane count while the block stays within the target bytes.
    if B <= sub:
        tb = B
    else:
        tb = sub
        while tb * 2 <= B and tb * 2 * tf * itemsize <= target_bytes:
            tb *= 2

    # Guarantee >=2 blocks along a parallel axis for medium inputs so both
    # v7x TensorCores (megacore sharding) get work; skip for tiny tensors
    # where the extra grid step would just add overhead.
    total_bytes = B * F * itemsize
    if _cdiv(B, tb) * _cdiv(F, tf) < 2 and total_bytes >= (512 << 10):
        if tf >= 2 * _LANE:
            tf = _round_up(_cdiv(tf, 2), _LANE)
        elif tb >= 2 * sub:
            tb = _round_up(_cdiv(tb, 2), sub)

    return tb, tf


def drop_path(x, drop_prob=0.0, training=False, seed=0):
    """JAX/Pallas equivalent of the PyTorch drop_path function."""
    if drop_prob is None or drop_prob == 0.0 or not training:
        return x
    keep_prob = 1.0 - float(drop_prob)

    orig_shape = x.shape
    B = int(orig_shape[0])
    F = int(np.prod(orig_shape[1:])) if len(orig_shape) > 1 else 1

    # Per-sample mask drawn once in the wrapper (tiny (B, 1) f32 array).
    # Faithful to the reference: floor(rand) == 0, so mask == keep_prob and
    # scale == 1.0 for every sample (training path is the identity).
    key = jax.random.PRNGKey(int(seed))
    u = jax.random.uniform(key, (B, 1), dtype=jnp.float32)
    mask = jnp.float32(keep_prob) + jnp.floor(u)
    scale = mask / jnp.float32(keep_prob)           # stays f32 into the kernel

    xf = x.reshape(B, F)  # metadata-only reshape, no extra HBM pass
    itemsize = int(jnp.dtype(x.dtype).itemsize)
    target_bytes, vmem_limit = _generation_budget()
    tb, tf = _choose_tiles(B, F, itemsize, target_bytes)
    grid = (_cdiv(B, tb), _cdiv(F, tf))

    cost = pl.CostEstimate(
        flops=B * F,
        transcendentals=0,
        bytes_accessed=2 * B * F * itemsize + B * 4,
    )

    yf = pl.pallas_call(
        _drop_path_kernel,
        out_shape=jax.ShapeDtypeStruct((B, F), x.dtype),
        grid=grid,
        in_specs=[
            pl.BlockSpec((tb, tf), lambda i, j: (i, j)),
            pl.BlockSpec((tb, 1), lambda i, j: (i, 0)),
        ],
        out_specs=pl.BlockSpec((tb, tf), lambda i, j: (i, j)),
        compiler_params=pltpu.CompilerParams(
            dimension_semantics=("parallel", "parallel"),
            vmem_limit_bytes=vmem_limit,
        ),
        cost_estimate=cost,
    )(xf, scale)

    return yf.reshape(orig_shape)


class DropPath:
    """DropPath module mirroring the PyTorch nn.Module."""

    def __init__(self, drop_prob=None):
        self.drop_prob = drop_prob

    def __call__(self, x, training=False, seed=0):
        return drop_path(x, self.drop_prob, training, seed)


if __name__ == "__main__":
    key = jax.random.PRNGKey(0)
    # small NCHW input consistent with a ViT-style feature map
    x = jax.random.normal(key, (2, 4, 16, 16), dtype=jnp.float32)

    mod = DropPath(drop_prob=0.1)

    # training path (kernel runs, per-sample scale applied)
    y_train = jax.block_until_ready(mod(x, training=True, seed=0))
    # eval path (identity, matches `if drop_prob == 0.0 or not training`)
    y_eval = jax.block_until_ready(mod(x, training=False))

    assert y_train.shape == x.shape and y_train.dtype == x.dtype
    # Reference semantics: floor(rand)=0 -> mask=keep_prob -> scale=1 -> y == x
    np.testing.assert_allclose(np.asarray(y_train), np.asarray(x), rtol=1e-6, atol=1e-6)
    np.testing.assert_allclose(np.asarray(y_eval), np.asarray(x), rtol=0, atol=0)

    # bf16 path with a non-128-multiple feature count: exercises the dtype-aware
    # sublane tile (16 for bf16) and the full-axis / ragged-F handling.
    xb = jax.random.normal(jax.random.PRNGKey(1), (16, 3, 10, 20), dtype=jnp.bfloat16)
    yb = jax.block_until_ready(drop_path(xb, 0.2, training=True, seed=3))
    assert yb.shape == xb.shape and yb.dtype == xb.dtype
    np.testing.assert_allclose(np.asarray(yb, dtype=np.float32),
                               np.asarray(xb, dtype=np.float32), rtol=0, atol=0)

    print("KERNEL_OK")
</pallas_src>

<mosaic_0001>
module attributes {stable_mosaic.version = 11 : i64} {
  func.func @_drop_path_kernel(%arg0: i32, %arg1: i32, %arg2: memref<2x1024xf32, #tpu.memory_space<vmem>>, %arg3: memref<2x1xf32, #tpu.memory_space<vmem>>, %arg4: memref<2x1024xf32, #tpu.memory_space<vmem>>) attributes {dimension_semantics = [#tpu.dimension_semantics<parallel>, #tpu.dimension_semantics<parallel>], iteration_bounds = array<i64: 1, 1>, scalar_prefetch = 0 : i64, scratch_operands = 0 : i64, tpu.core_type = #tpu.core_type<tc>, window_params = [{transform_indices = @transform_0, window_bounds = array<i64: 2, 1024>}, {transform_indices = @transform_1, window_bounds = array<i64: 2, 1>}, {transform_indices = @transform_2, window_bounds = array<i64: 2, 1024>}]} {
    %c0 = arith.constant 0 : index
    %c0_0 = arith.constant 0 : index
    %0 = vector.load %arg2[%c0, %c0_0] : memref<2x1024xf32, #tpu.memory_space<vmem>>, vector<2x1024xf32>
    %c0_1 = arith.constant 0 : index
    %c0_2 = arith.constant 0 : index
    %1 = vector.load %arg3[%c0_1, %c0_2] : memref<2x1xf32, #tpu.memory_space<vmem>>, vector<2x1xf32>
    %2 = vector.broadcast %1 : vector<2x1xf32> to vector<2x1024xf32>
    %3 = arith.mulf %0, %2 : vector<2x1024xf32>
    %c0_3 = arith.constant 0 : index
    %c0_4 = arith.constant 0 : index
    %4 = vector.load %arg4[%c0_3, %c0_4] : memref<2x1024xf32, #tpu.memory_space<vmem>>, vector<2x1024xf32>
    tpu.vector_store %arg4[%c0_3, %c0_4], %3 {strides = array<i32>} : memref<2x1024xf32, #tpu.memory_space<vmem>>, vector<2x1024xf32>,
    return
  }
  func.func @transform_0(%arg0: i32, %arg1: i32) -> (i32, i32) {
    %c0_i32 = arith.constant 0 : i32
    return %arg0, %arg1 : i32, i32
  }
  func.func @transform_1(%arg0: i32, %arg1: i32) -> (i32, i32) {
    %c0_i32 = arith.constant 0 : i32
    %c0_i32_0 = arith.constant 0 : i32
    return %arg0, %c0_i32 : i32, i32
  }
  func.func @transform_2(%arg0: i32, %arg1: i32) -> (i32, i32) {
    %c0_i32 = arith.constant 0 : i32
    return %arg0, %arg1 : i32, i32
  }
}

</mosaic_0001>

<llo_original>
// kernel: tpu_custom_call.1
$region0: #{tpu_custom_call.1}
  #allocation0 [shape = 'u32[]', space=smem, size = 0x4, offset = 0x4, fixed_abs, tag = 'smem constant byte address 0x4 - core index']
  #allocation1 [shape = 'u32[144,128]{1,0:T(1,128)}', space=vmem, size = 0x12000, scoped, tag = 'internal scratch']
  %s0 = inlined_call_operand.hbm [shape: f32[2,1024], index: 0, kind: input, shape index: {}]
  %s1 = inlined_call_operand.vmem [shape: f32[2,1], index: 1, kind: input, shape index: {}]
  %s2 = inlined_call_operand.hbm [shape: f32[2,1024], index: 2, kind: output, shape index: {}]
  %s3 = sld [smem:[#allocation0]]
  $region22: #{tpu_custom_call.1} parent=0
    _
  %s5 = ssub.s32 1, %s3
  %s6 = scalar_select 0, %s5, %s3
  $region1: #{tpu_custom_call.1} parent=0
    #allocation2 [shape = 'u8[8192]{0}', space=vmem, size = 0x2000, scoped, tag = 'input window, operand 0, single buffered']
    #allocation3 [shape = 's32[1]{0}', space=sflag, size = 0x4, scoped, tag = 'scoped memory for tpu_custom_call.1']
    #allocation4 [shape = 's32[1]{0}', space=sflag, size = 0x4, scoped, tag = 'scoped memory for tpu_custom_call.1']
    #allocation5 [shape = 'u8[8192]{0}', space=vmem, size = 0x2000, scoped, tag = 'output window, operand 0, single buffered']
    %7 = vsyncpa [#allocation3], 0
    %8 = vsyncpa [#allocation4], 0
    // Predicated region
    $region2: #{tpu_custom_call.1} parent=1 // pred_check
      _
    $region3: #{tpu_custom_call.1} parent=1 // pred_check_branch
      %10 = sbr.rel (0) target = $region5
    $region4: #{tpu_custom_call.1} parent=1 // pred_region
      %s12 = ssub.s32 256, 256
      %13 = vsyncadd [#allocation3], %s12
      %s15 = sshll.u32 [#allocation2], 4
      %s16 = int_to_ptr.vmem [resolvable:$true] %s15
      %18 = dma.hbm_to_vmem [thread:$0]  %s0, 256, %s16, [#allocation3]
    $region5: #{tpu_custom_call.1} parent=1 // pred_fallthru
      _
    // Predicated region
    $region6: #{tpu_custom_call.1} parent=1 // pred_check
      _
    $region7: #{tpu_custom_call.1} parent=1 // pred_check_branch
      %20 = sbr.rel (0) target = $region9
    $region8: #{tpu_custom_call.1} parent=1 // pred_region
      _
    $region9: #{tpu_custom_call.1} parent=1 // pred_fallthru
      _
    // Predicated region
    $region10: #{tpu_custom_call.1} parent=1 // pred_check
      _
    $region11: #{tpu_custom_call.1} parent=1 // pred_check_branch
      %22 = sbr.rel (0) target = $region13
    $region12: #{tpu_custom_call.1} parent=1 // pred_region
      %23 = dma.done [#allocation3], 256
    $region13: #{tpu_custom_call.1} parent=1 // pred_fallthru
      _
    %v24 = vld [vmem:[#allocation2] sm:$0xff]
    %v25 = vld [vmem:[#allocation2 + $0x8] sm:$0xff]
    %v26 = vld [vmem:[%s1] sm:$0x3]
    %28 = vset.pattern.permute.xlu0 0
    %29 = vperm.xlu0 %28, %v26
    %v30 = vpop.permute.xlu0 %29
    %v32 = vunpack.c.l.s4 269488144
    %v33 = vunpack.c.0.s8 %v32
    %v34 = vlaneseq
    %v35 = vshrl.u32 %v34, 7
    %v36 = vsub.s32 %v33, %v35
    %v37 = vrot.slane %v30, %v36
    %v39 = vmul.f32 %v24, %v37
    %v40 = vmul.f32 %v25, %v37
    %41 = vst [vmem:[#allocation5] sm:$0xff] %v39
    %42 = vst [vmem:[#allocation5 + $0x8] sm:$0xff] %v40
    // Predicated region
    $region14: #{tpu_custom_call.1} parent=1 // pred_check
      _
    $region15: #{tpu_custom_call.1} parent=1 // pred_check_branch
      %44 = sbr.rel (0) target = $region17
    $region16: #{tpu_custom_call.1} parent=1 // pred_region
      %s46 = ssub.s32 256, 256
      %47 = vsyncadd [#allocation4], %s46
      %s49 = sshll.u32 [#allocation5], 4
      %s50 = int_to_ptr.vmem [resolvable:$true] %s49
      %52 = dma.vmem_to_hbm [thread:$0]  %s50, 256, %s2, [#allocation4]
    $region17: #{tpu_custom_call.1} parent=1 // pred_fallthru
      _
    // Predicated region
    $region18: #{tpu_custom_call.1} parent=1 // pred_check
      _
    $region19: #{tpu_custom_call.1} parent=1 // pred_check_branch
      %54 = sbr.rel (0) target = $region21
    $region20: #{tpu_custom_call.1} parent=1 // pred_region
      %55 = dma.done [#allocation4], 256
    $region21: #{tpu_custom_call.1} parent=1 // pred_fallthru
      _
    %56 = vsyncpa [#allocation3], 1
    %57 = vsyncpa [#allocation4], 1

</llo_original>
